<compile_context>
chip_gen: v6e
topology: v6e:2x2x1
jax: 0.10.0
libtpu: 0.0.40
codegen_flags: <defaults>
</compile_context>

<pallas_src>
import numpy as np
import jax
import jax.numpy as jnp
from jax import lax
from jax.experimental import pallas as pl
from jax.experimental.pallas import tpu as pltpu

DIM = 10          # deminsion
TOPK = 10         # topK_Position
P_HID = 14        # propensity_hidden_layer
R_HID = 12        # relevance_hidden_layer
KK = TOPK * TOPK  # 100

H1 = P_HID + R_HID          # 26  fused layer-1/2 width
H3 = TOPK + R_HID           # 22  fused layer-3 width
H4 = 128                    # fused layer-4 width: [p4(10) | r4(100) | pad] -> 128
EPI = 256                   # epilogue matmul width (two aligned 128-lane blocks)
SYM_OFF = 128               # lane offset of the (R + R^T) block in the epilogue
MAX_TILE = 1024             # max batch rows per grid step (VMEM-safe everywhere)


def _make_kernel(bt, n_valid, need_mask):
    """Kernel factory: bt = rows per block, n_valid = true batch, need_mask =
    whether padded rows exist and must be excluded from loss/err."""

    def kernel(x_ref, y_ref, click_ref, nclick_ref, m_ref,
               w1_ref, b1_ref, w2_ref, b2_ref, w3_ref, b3_ref, w4_ref, b4_ref,
               pred_ref, stats_ref):

        def lrelu(v):
            # torch.nn.functional.leaky_relu default negative_slope = 0.01
            return jnp.where(v >= 0.0, v, 0.01 * v)

        def fused_linear(a, w_ref_, b_ref_):
            # bf16 MXU inputs, f32 accumulation, f32 bias / activations.
            return (jnp.dot(a.astype(jnp.bfloat16), w_ref_[...],
                            preferred_element_type=jnp.float32) + b_ref_[...])

        x = x_ref[...]                                          # (bt, 10) f32

        # fused [propensity | relevance] towers (block-diagonal packed weights)
        h = lrelu(fused_linear(x, w1_ref, b1_ref))              # (bt, 26)
        h = lrelu(fused_linear(h, w2_ref, b2_ref))              # (bt, 26)
        h = lrelu(fused_linear(h, w3_ref, b3_ref))              # (bt, 22)
        h4 = jax.nn.sigmoid(fused_linear(h, w4_ref, b4_ref))    # (bt, 128): [p4|r4|pad]

        # single block-diagonal epilogue matmul:
        #   lanes [0, 100)    -> p4 broadcast over the column index j
        #   lanes [128, 228)  -> R + R^T   (identity folded into the perm block)
        out = jnp.dot(h4.astype(jnp.bfloat16), m_ref[...],
                      preferred_element_type=jnp.float32)       # (bt, 256)
        p4_rep = out[:, :KK]                                    # (bt, 100)
        sym = 0.5 * out[:, SYM_OFF:SYM_OFF + KK]                # (bt, 100)

        exam = jnp.clip(p4_rep * sym, 1e-6, 1.0 - 1e-6)
        per_elem = (jnp.log(exam) * click_ref[...]
                    + jnp.log(1.0 - exam) * nclick_ref[...])    # (bt, 100)

        # predicted propensity normalized by position 0 (EUP approx reciprocal)
        inv_p0 = pl.reciprocal(h4[:, 0:1], approx=True)         # (bt, 1)
        pred10 = h4[:, :TOPK] * inv_p0                          # (bt, 10)
        pred_ref[...] = pred10                                  # direct (bt, TOPK) store

        err_elems = jnp.abs((y_ref[...] - pred10) *
                            pl.reciprocal(y_ref[...], approx=True))   # (bt, 10)

        if need_mask:
            # zero out contributions from batch-padding rows
            row = (pl.program_id(0) * bt
                   + lax.broadcasted_iota(jnp.int32, (bt, 1), 0))
            valid = (row < n_valid).astype(jnp.float32)         # (bt, 1)
            per_elem = per_elem * valid
            err_elems = err_elems * valid

        loss_b = (-jnp.sum(per_elem)).reshape(1, 1)
        err_b = jnp.sum(err_elems).reshape(1, 1)

        # per-block partial loss / err, packed into a lane-dense (8, 128) block:
        # row 0 lane 0 = loss, row 0 lane 1 = err, everything else zero.
        r8 = lax.broadcasted_iota(jnp.int32, (8, 128), 0)
        c8 = lax.broadcasted_iota(jnp.int32, (8, 128), 1)
        is_loss = ((r8 == 0) & (c8 == 0)).astype(jnp.float32)
        is_err = ((r8 == 0) & (c8 == 1)).astype(jnp.float32)
        stats_ref[...] = loss_b * is_loss + err_b * is_err

    return kernel


def _linear_params(key, fan_in, fan_out):
    # deterministic, PyTorch-Linear-style U(-1/sqrt(fan_in), 1/sqrt(fan_in))
    kw, kb = jax.random.split(key)
    bound = 1.0 / (fan_in ** 0.5)
    w = jax.random.uniform(kw, (fan_out, fan_in), jnp.float32, -bound, bound)
    b = jax.random.uniform(kb, (fan_out,), jnp.float32, -bound, bound)
    return w, b


def init_params(seed=0):
    keys = jax.random.split(jax.random.PRNGKey(seed), 8)
    return [
        _linear_params(keys[0], DIM, P_HID),          # propensity_layer1
        _linear_params(keys[1], P_HID, P_HID),        # propensity_layer2
        _linear_params(keys[2], P_HID, TOPK),         # propensity_layer3
        # TODO(synk): propensity_layer4 is used in forward() but never defined in
        # __init__ of the reference module (it would crash in PyTorch); synthesized
        # here as Linear(TOPK, TOPK) to match the shapes implied by forward().
        _linear_params(keys[3], TOPK, TOPK),          # propensity_layer4 (synthesized)
        _linear_params(keys[4], DIM, R_HID),          # relevance_layer1
        _linear_params(keys[5], R_HID, R_HID),        # relevance_layer2
        _linear_params(keys[6], R_HID, R_HID),        # relevance_layer3
        _linear_params(keys[7], R_HID, TOPK * TOPK),  # relevance_layer4
    ]


def _block_diag(a, b):
    ma, na = a.shape
    mb, nb = b.shape
    top = jnp.concatenate([a, jnp.zeros((ma, nb), a.dtype)], axis=1)
    bot = jnp.concatenate([jnp.zeros((mb, na), b.dtype), b], axis=1)
    return jnp.concatenate([top, bot], axis=0)


def _pack_params(params):
    (pw1, pb1), (pw2, pb2), (pw3, pb3), (pw4, pb4) = params[:4]
    (rw1, rb1), (rw2, rb2), (rw3, rb3), (rw4, rb4) = params[4:]

    # weights stored (in, out); both towers packed block-diagonally so every
    # layer is a single fused matmul.
    w1 = jnp.concatenate([pw1.T, rw1.T], axis=1)                    # (10, 26)
    w2 = _block_diag(pw2.T, rw2.T)                                  # (26, 26)
    w3 = _block_diag(pw3.T, rw3.T)                                  # (26, 22)
    w4 = _block_diag(pw4.T, rw4.T)                                  # (22, 110)
    w4 = jnp.pad(w4, ((0, 0), (0, H4 - w4.shape[1])))               # (22, 128)

    b1 = jnp.concatenate([pb1, rb1])[None, :]                       # (1, 26)
    b2 = jnp.concatenate([pb2, rb2])[None, :]                       # (1, 26)
    b3 = jnp.concatenate([pb3, rb3])[None, :]                       # (1, 22)
    b4 = jnp.concatenate([pb4, rb4])[None, :]                       # (1, 110)
    b4 = jnp.pad(b4, ((0, 0), (0, H4 - b4.shape[1])))               # (1, 128)

    bf16 = jnp.bfloat16
    return (w1.astype(bf16), b1, w2.astype(bf16), b2,
            w3.astype(bf16), b3, w4.astype(bf16), b4)


def _epilogue_matrix():
    """(128, 256) bf16 block-diagonal matrix fusing expand + (perm + I)."""
    m = np.zeros((H4, EPI), np.float32)
    # expand block: out[:, i*K + j] = p4[:, i]   (p4 lives in h4 lanes [0, K))
    for i in range(TOPK):
        m[i, i * TOPK:(i + 1) * TOPK] = 1.0
    # perm + identity block: out[:, SYM_OFF + i*K + j] = R[i, j] + R[j, i]
    # (h4 lane K + i*K + j holds R[i, j]); the diagonal naturally gets 2*R[i, i].
    for i in range(TOPK):
        for j in range(TOPK):
            c = SYM_OFF + i * TOPK + j
            m[TOPK + i * TOPK + j, c] += 1.0
            m[TOPK + j * TOPK + i, c] += 1.0
    return jnp.asarray(m, jnp.bfloat16)


def _pick_tiling(batch):
    """Return (rows_per_block, padded_batch)."""
    if batch <= MAX_TILE:
        return batch, batch            # single block equal to the full array
    # prefer an exact multiple-of-8 divisor <= MAX_TILE (no padding needed)
    for t in range(MAX_TILE, 7, -8):
        if batch % t == 0:
            return t, batch
    # otherwise tile at MAX_TILE and pad the batch up to a tile multiple
    bt = MAX_TILE
    return bt, (-(-batch // bt)) * bt


def net_forward(params, x, y, click, not_click):
    batch = x.shape[0]
    bt, batch_pad = _pick_tiling(batch)
    nblk = batch_pad // bt
    need_mask = batch_pad != batch

    x_f = x.astype(jnp.float32)
    y_f = y.astype(jnp.float32)
    click_f = click.reshape(batch, KK).astype(jnp.float32)
    nclick_f = not_click.reshape(batch, KK).astype(jnp.float32)

    if need_mask:
        pad = batch_pad - batch
        x_f = jnp.pad(x_f, ((0, pad), (0, 0)))
        y_f = jnp.pad(y_f, ((0, pad), (0, 0)), constant_values=1.0)  # avoid 1/0
        click_f = jnp.pad(click_f, ((0, pad), (0, 0)))
        nclick_f = jnp.pad(nclick_f, ((0, pad), (0, 0)))

    m = _epilogue_matrix()
    w1, b1, w2, b2, w3, b3, w4, b4 = _pack_params(params)

    def batch_spec(feat):
        return pl.BlockSpec((bt, feat), lambda i: (i, 0))

    def const_spec(arr):
        return pl.BlockSpec(arr.shape, lambda i: (0, 0))

    operands = (x_f, y_f, click_f, nclick_f,
                m, w1, b1, w2, b2, w3, b3, w4, b4)
    in_specs = [batch_spec(DIM), batch_spec(TOPK), batch_spec(KK), batch_spec(KK)]
    in_specs += [const_spec(a) for a in operands[4:]]

    pred_pad, stats = pl.pallas_call(
        _make_kernel(bt, batch, need_mask),
        grid=(nblk,),
        in_specs=in_specs,
        out_specs=(pl.BlockSpec((bt, TOPK), lambda i: (i, 0)),
                   pl.BlockSpec((8, 128), lambda i: (i, 0))),
        out_shape=(jax.ShapeDtypeStruct((batch_pad, TOPK), jnp.float32),
                   jax.ShapeDtypeStruct((8 * nblk, 128), jnp.float32)),
        compiler_params=pltpu.CompilerParams(
            # batch blocks are independent -> shard across v7x's two TensorCores
            dimension_semantics=("parallel",)),
    )(*operands)

    loss = jnp.sum(stats[:, 0])     # per-block partials -> scalar
    err = jnp.sum(stats[:, 1])
    pred = pred_pad[:batch] if need_mask else pred_pad
    return loss, err, pred


def net_forward_ref(params, x, y, click, not_click):
    # pure-JAX f32 reference for sanity checking
    def lrelu(v):
        return jnp.where(v >= 0, v, 0.01 * v)

    def lin(a, wb):
        w, b = wb
        return a @ w.T + b

    batch = x.shape[0]
    k = TOPK
    p_par, r_par = params[:4], params[4:]
    p = lrelu(lin(x, p_par[0]))
    p = lrelu(lin(p, p_par[1]))
    p = lrelu(lin(p, p_par[2]))
    p4 = jax.nn.sigmoid(lin(p, p_par[3]))
    r = lrelu(lin(x, r_par[0]))
    r = lrelu(lin(r, r_par[1]))
    r = lrelu(lin(r, r_par[2]))
    r4 = jax.nn.sigmoid(lin(r, r_par[3])).reshape(batch, k, k)
    sym = 0.5 * (r4 + jnp.transpose(r4, (0, 2, 1)))
    exam = jnp.clip(p4.reshape(batch, k, 1) * sym, 1e-6, 1.0 - 1e-6)
    loss = -jnp.sum(jnp.log(exam) * click + jnp.log(1.0 - exam) * not_click)
    pred = p4 / p4[:, 0:1]
    err = jnp.sum(jnp.abs((y - pred) / y))
    return loss, err, pred


if __name__ == "__main__":
    B = 8
    key = jax.random.PRNGKey(0)
    kx, ky, kc = jax.random.split(key, 3)

    x = jax.random.normal(kx, (B, DIM), jnp.float32)
    y = jax.random.uniform(ky, (B, TOPK), jnp.float32, 0.1, 1.0)   # nonzero (divided by)
    click = (jax.random.uniform(kc, (B, TOPK, TOPK)) < 0.3).astype(jnp.float32)
    not_click = 1.0 - click

    params = init_params(seed=0)

    fwd = jax.jit(net_forward)
    loss, err, pred = fwd(params, x, y, click, not_click)
    jax.block_until_ready((loss, err, pred))

    loss_r, err_r, pred_r = net_forward_ref(params, x, y, click, not_click)
    assert jnp.allclose(loss, loss_r, rtol=5e-2, atol=5e-2), (loss, loss_r)
    assert jnp.allclose(err, err_r, rtol=5e-2, atol=5e-2), (err, err_r)
    assert jnp.allclose(pred, pred_r, rtol=5e-2, atol=5e-2)

    print("KERNEL_OK")
</pallas_src>

<mosaic_0001>
module attributes {stable_mosaic.version = 11 : i64} {
  func.func @kernel(%arg0: i32, %arg1: memref<8x10xf32, #tpu.memory_space<vmem>>, %arg2: memref<8x10xf32, #tpu.memory_space<vmem>>, %arg3: memref<8x100xf32, #tpu.memory_space<vmem>>, %arg4: memref<8x100xf32, #tpu.memory_space<vmem>>, %arg5: memref<128x256xbf16, #tpu.memory_space<vmem>>, %arg6: memref<10x26xbf16, #tpu.memory_space<vmem>>, %arg7: memref<1x26xf32, #tpu.memory_space<vmem>>, %arg8: memref<26x26xbf16, #tpu.memory_space<vmem>>, %arg9: memref<1x26xf32, #tpu.memory_space<vmem>>, %arg10: memref<26x22xbf16, #tpu.memory_space<vmem>>, %arg11: memref<1x22xf32, #tpu.memory_space<vmem>>, %arg12: memref<22x128xbf16, #tpu.memory_space<vmem>>, %arg13: memref<1x128xf32, #tpu.memory_space<vmem>>, %arg14: memref<8x10xf32, #tpu.memory_space<vmem>>, %arg15: memref<8x128xf32, #tpu.memory_space<vmem>>) attributes {dimension_semantics = [#tpu.dimension_semantics<parallel>], iteration_bounds = array<i64: 1>, scalar_prefetch = 0 : i64, scratch_operands = 0 : i64, tpu.core_type = #tpu.core_type<tc>, window_params = [{transform_indices = @transform_0, window_bounds = array<i64: 8, 10>}, {transform_indices = @transform_1, window_bounds = array<i64: 8, 10>}, {transform_indices = @transform_2, window_bounds = array<i64: 8, 100>}, {transform_indices = @transform_3, window_bounds = array<i64: 8, 100>}, {pipeline_mode = #tpu.pipeline_mode<synchronous>, transform_indices = @transform_4, window_bounds = array<i64: 128, 256>}, {pipeline_mode = #tpu.pipeline_mode<synchronous>, transform_indices = @transform_5, window_bounds = array<i64: 10, 26>}, {pipeline_mode = #tpu.pipeline_mode<synchronous>, transform_indices = @transform_6, window_bounds = array<i64: 1, 26>}, {pipeline_mode = #tpu.pipeline_mode<synchronous>, transform_indices = @transform_7, window_bounds = array<i64: 26, 26>}, {pipeline_mode = #tpu.pipeline_mode<synchronous>, transform_indices = @transform_8, window_bounds = array<i64: 1, 26>}, {pipeline_mode = #tpu.pipeline_mode<synchronous>, transform_indices = @transform_9, window_bounds = array<i64: 26, 22>}, {pipeline_mode = #tpu.pipeline_mode<synchronous>, transform_indices = @transform_10, window_bounds = array<i64: 1, 22>}, {pipeline_mode = #tpu.pipeline_mode<synchronous>, transform_indices = @transform_11, window_bounds = array<i64: 22, 128>}, {pipeline_mode = #tpu.pipeline_mode<synchronous>, transform_indices = @transform_12, window_bounds = array<i64: 1, 128>}, {transform_indices = @transform_13, window_bounds = array<i64: 8, 10>}, {transform_indices = @transform_14, window_bounds = array<i64: 8, 128>}]} {
    %c0 = arith.constant 0 : index
    %c0_0 = arith.constant 0 : index
    %0 = vector.load %arg1[%c0, %c0_0] : memref<8x10xf32, #tpu.memory_space<vmem>>, vector<8x10xf32>
    %1 = arith.truncf %0 : vector<8x10xf32> to vector<8x10xbf16>
    %c0_1 = arith.constant 0 : index
    %c0_2 = arith.constant 0 : index
    %2 = vector.load %arg6[%c0_1, %c0_2] : memref<10x26xbf16, #tpu.memory_space<vmem>>, vector<10x26xbf16>
    %cst = arith.constant dense<0.000000e+00> : vector<8x26xf32>
    %3 = tpu.matmul %1, %2, %cst {dimension_numbers = #tpu.dot_dimension_numbers<[1], [0], [0], [1], [0, 0, 1, 1], [], []>} : vector<8x10xbf16>, vector<10x26xbf16>, vector<8x26xf32> -> vector<8x26xf32>
    %c0_3 = arith.constant 0 : index
    %c0_4 = arith.constant 0 : index
    %4 = vector.load %arg7[%c0_3, %c0_4] : memref<1x26xf32, #tpu.memory_space<vmem>>, vector<1x26xf32>
    %5 = vector.broadcast %4 : vector<1x26xf32> to vector<8x26xf32>
    %6 = arith.addf %3, %5 : vector<8x26xf32>
    %cst_5 = arith.constant 0.000000e+00 : f32
    %7 = vector.broadcast %cst_5 : f32 to vector<8x26xf32>
    %8 = arith.cmpf oge, %6, %7 : vector<8x26xf32>
    %cst_6 = arith.constant 0.00999999977 : f32
    %9 = vector.broadcast %cst_6 : f32 to vector<8x26xf32>
    %10 = arith.mulf %9, %6 : vector<8x26xf32>
    %11 = arith.select %8, %6, %10 : vector<8x26xi1>, vector<8x26xf32>
    %12 = arith.truncf %11 : vector<8x26xf32> to vector<8x26xbf16>
    %c0_7 = arith.constant 0 : index
    %c0_8 = arith.constant 0 : index
    %13 = vector.load %arg8[%c0_7, %c0_8] : memref<26x26xbf16, #tpu.memory_space<vmem>>, vector<26x26xbf16>
    %cst_9 = arith.constant dense<0.000000e+00> : vector<8x26xf32>
    %14 = tpu.matmul %12, %13, %cst_9 {dimension_numbers = #tpu.dot_dimension_numbers<[1], [0], [0], [1], [0, 0, 1, 1], [], []>} : vector<8x26xbf16>, vector<26x26xbf16>, vector<8x26xf32> -> vector<8x26xf32>
    %c0_10 = arith.constant 0 : index
    %c0_11 = arith.constant 0 : index
    %15 = vector.load %arg9[%c0_10, %c0_11] : memref<1x26xf32, #tpu.memory_space<vmem>>, vector<1x26xf32>
    %16 = vector.broadcast %15 : vector<1x26xf32> to vector<8x26xf32>
    %17 = arith.addf %14, %16 : vector<8x26xf32>
    %cst_12 = arith.constant 0.000000e+00 : f32
    %18 = vector.broadcast %cst_12 : f32 to vector<8x26xf32>
    %19 = arith.cmpf oge, %17, %18 : vector<8x26xf32>
    %cst_13 = arith.constant 0.00999999977 : f32
    %20 = vector.broadcast %cst_13 : f32 to vector<8x26xf32>
    %21 = arith.mulf %20, %17 : vector<8x26xf32>
    %22 = arith.select %19, %17, %21 : vector<8x26xi1>, vector<8x26xf32>
    %23 = arith.truncf %22 : vector<8x26xf32> to vector<8x26xbf16>
    %c0_14 = arith.constant 0 : index
    %c0_15 = arith.constant 0 : index
    %24 = vector.load %arg10[%c0_14, %c0_15] : memref<26x22xbf16, #tpu.memory_space<vmem>>, vector<26x22xbf16>
    %cst_16 = arith.constant dense<0.000000e+00> : vector<8x22xf32>
    %25 = tpu.matmul %23, %24, %cst_16 {dimension_numbers = #tpu.dot_dimension_numbers<[1], [0], [0], [1], [0, 0, 1, 1], [], []>} : vector<8x26xbf16>, vector<26x22xbf16>, vector<8x22xf32> -> vector<8x22xf32>
    %c0_17 = arith.constant 0 : index
    %c0_18 = arith.constant 0 : index
    %26 = vector.load %arg11[%c0_17, %c0_18] : memref<1x22xf32, #tpu.memory_space<vmem>>, vector<1x22xf32>
    %27 = vector.broadcast %26 : vector<1x22xf32> to vector<8x22xf32>
    %28 = arith.addf %25, %27 : vector<8x22xf32>
    %cst_19 = arith.constant 0.000000e+00 : f32
    %29 = vector.broadcast %cst_19 : f32 to vector<8x22xf32>
    %30 = arith.cmpf oge, %28, %29 : vector<8x22xf32>
    %cst_20 = arith.constant 0.00999999977 : f32
    %31 = vector.broadcast %cst_20 : f32 to vector<8x22xf32>
    %32 = arith.mulf %31, %28 : vector<8x22xf32>
    %33 = arith.select %30, %28, %32 : vector<8x22xi1>, vector<8x22xf32>
    %34 = arith.truncf %33 : vector<8x22xf32> to vector<8x22xbf16>
    %c0_21 = arith.constant 0 : index
    %c0_22 = arith.constant 0 : index
    %35 = vector.load %arg12[%c0_21, %c0_22] : memref<22x128xbf16, #tpu.memory_space<vmem>>, vector<22x128xbf16>
    %cst_23 = arith.constant dense<0.000000e+00> : vector<8x128xf32>
    %36 = tpu.matmul %34, %35, %cst_23 {dimension_numbers = #tpu.dot_dimension_numbers<[1], [0], [0], [1], [0, 0, 1, 1], [], []>} : vector<8x22xbf16>, vector<22x128xbf16>, vector<8x128xf32> -> vector<8x128xf32>
    %c0_24 = arith.constant 0 : index
    %c0_25 = arith.constant 0 : index
    %37 = vector.load %arg13[%c0_24, %c0_25] : memref<1x128xf32, #tpu.memory_space<vmem>>, vector<1x128xf32>
    %38 = vector.broadcast %37 : vector<1x128xf32> to vector<8x128xf32>
    %39 = arith.addf %36, %38 : vector<8x128xf32>
    %40 = arith.negf %39 : vector<8x128xf32>
    %41 = math.exp %40 : vector<8x128xf32>
    %cst_26 = arith.constant 1.000000e+00 : f32
    %42 = vector.broadcast %cst_26 : f32 to vector<8x128xf32>
    %43 = arith.addf %42, %41 : vector<8x128xf32>
    %44 = arith.divf %42, %43 : vector<8x128xf32>
    %45 = arith.truncf %44 : vector<8x128xf32> to vector<8x128xbf16>
    %c0_27 = arith.constant 0 : index
    %c0_28 = arith.constant 0 : index
    %46 = vector.load %arg5[%c0_27, %c0_28] : memref<128x256xbf16, #tpu.memory_space<vmem>>, vector<128x256xbf16>
    %cst_29 = arith.constant dense<0.000000e+00> : vector<8x256xf32>
    %47 = tpu.matmul %45, %46, %cst_29 {dimension_numbers = #tpu.dot_dimension_numbers<[1], [0], [0], [1], [0, 0, 1, 1], [], []>} : vector<8x128xbf16>, vector<128x256xbf16>, vector<8x256xf32> -> vector<8x256xf32>
    %48 = vector.extract_strided_slice %47 {offsets = [0, 0], sizes = [8, 100], strides = [1, 1]} : vector<8x256xf32> to vector<8x100xf32>
    %49 = vector.extract_strided_slice %47 {offsets = [0, 128], sizes = [8, 100], strides = [1, 1]} : vector<8x256xf32> to vector<8x100xf32>
    %cst_30 = arith.constant 5.000000e-01 : f32
    %50 = vector.broadcast %cst_30 : f32 to vector<8x100xf32>
    %51 = arith.mulf %50, %49 : vector<8x100xf32>
    %52 = arith.mulf %48, %51 : vector<8x100xf32>
    %cst_31 = arith.constant 9.99999997E-7 : f32
    %cst_32 = arith.constant 0.999998986 : f32
    %53 = vector.broadcast %cst_31 : f32 to vector<8x100xf32>
    %54 = arith.maximumf %53, %52 : vector<8x100xf32>
    %55 = vector.broadcast %cst_32 : f32 to vector<8x100xf32>
    %56 = arith.minimumf %55, %54 : vector<8x100xf32>
    %57 = math.log %56 : vector<8x100xf32>
    %c0_33 = arith.constant 0 : index
    %c0_34 = arith.constant 0 : index
    %58 = vector.load %arg3[%c0_33, %c0_34] : memref<8x100xf32, #tpu.memory_space<vmem>>, vector<8x100xf32>
    %59 = arith.mulf %57, %58 : vector<8x100xf32>
    %cst_35 = arith.constant 1.000000e+00 : f32
    %60 = vector.broadcast %cst_35 : f32 to vector<8x100xf32>
    %61 = arith.subf %60, %56 : vector<8x100xf32>
    %62 = math.log %61 : vector<8x100xf32>
    %c0_36 = arith.constant 0 : index
    %c0_37 = arith.constant 0 : index
    %63 = vector.load %arg4[%c0_36, %c0_37] : memref<8x100xf32, #tpu.memory_space<vmem>>, vector<8x100xf32>
    %64 = arith.mulf %62, %63 : vector<8x100xf32>
    %65 = arith.addf %59, %64 : vector<8x100xf32>
    %66 = vector.extract_strided_slice %44 {offsets = [0, 0], sizes = [8, 1], strides = [1, 1]} : vector<8x128xf32> to vector<8x1xf32>
    %67 = tpu.reciprocal %66 {approx = true} : vector<8x1xf32> -> vector<8x1xf32>
    %68 = vector.extract_strided_slice %44 {offsets = [0, 0], sizes = [8, 10], strides = [1, 1]} : vector<8x128xf32> to vector<8x10xf32>
    %69 = vector.broadcast %67 : vector<8x1xf32> to vector<8x10xf32>
    %70 = arith.mulf %68, %69 : vector<8x10xf32>
    %c0_38 = arith.constant 0 : index
    %c0_39 = arith.constant 0 : index
    %71 = vector.load %arg14[%c0_38, %c0_39] : memref<8x10xf32, #tpu.memory_space<vmem>>, vector<8x10xf32>
    tpu.vector_store %arg14[%c0_38, %c0_39], %70 {strides = array<i32>} : memref<8x10xf32, #tpu.memory_space<vmem>>, vector<8x10xf32>,
    %c0_40 = arith.constant 0 : index
    %c0_41 = arith.constant 0 : index
    %72 = vector.load %arg2[%c0_40, %c0_41] : memref<8x10xf32, #tpu.memory_space<vmem>>, vector<8x10xf32>
    %73 = arith.subf %72, %70 : vector<8x10xf32>
    %c0_42 = arith.constant 0 : index
    %c0_43 = arith.constant 0 : index
    %74 = vector.load %arg2[%c0_42, %c0_43] : memref<8x10xf32, #tpu.memory_space<vmem>>, vector<8x10xf32>
    %75 = tpu.reciprocal %74 {approx = true} : vector<8x10xf32> -> vector<8x10xf32>
    %76 = arith.mulf %73, %75 : vector<8x10xf32>
    %77 = math.absf %76 : vector<8x10xf32>
    %78 = vector.shape_cast %65 : vector<8x100xf32> to vector<1x8x100xf32>
    %cst_44 = arith.constant dense<0.000000e+00> : vector<1xf32>
    %79 = vector.multi_reduction <add>, %78, %cst_44 [1, 2] : vector<1x8x100xf32> to vector<1xf32>
    %80 = vector.shape_cast %79 : vector<1xf32> to vector<1x1x1xf32>
    %81 = vector.extract %80[0, 0, 0] : f32 from vector<1x1x1xf32>
    %cst_45 = arith.constant 0.000000e+00 : f32
    %82 = arith.subf %cst_45, %81 : f32
    %83 = vector.broadcast %82 : f32 to vector<1x1xf32>
    %84 = vector.shape_cast %77 : vector<8x10xf32> to vector<1x8x10xf32>
    %cst_46 = arith.constant dense<0.000000e+00> : vector<1xf32>
    %85 = vector.multi_reduction <add>, %84, %cst_46 [1, 2] : vector<1x8x10xf32> to vector<1xf32>
    %86 = vector.shape_cast %85 : vector<1xf32> to vector<1x1x1xf32>
    %87 = vector.extract %86[0, 0, 0] : f32 from vector<1x1x1xf32>
    %88 = vector.broadcast %87 : f32 to vector<1x1xf32>
    %89 = tpu.iota {dimensions = array<i32: 0>} : vector<8x128xi32>
    %90 = tpu.iota {dimensions = array<i32: 1>} : vector<8x128xi32>
    %c0_i32 = arith.constant 0 : i32
    %91 = vector.broadcast %c0_i32 : i32 to vector<8x128xi32>
    %92 = arith.cmpi eq, %89, %91 : vector<8x128xi32>
    %c0_i32_47 = arith.constant 0 : i32
    %93 = vector.broadcast %c0_i32_47 : i32 to vector<8x128xi32>
    %94 = arith.cmpi eq, %90, %93 : vector<8x128xi32>
    %95 = arith.andi %92, %94 : vector<8x128xi1>
    %96 = arith.extui %95 : vector<8x128xi1> to vector<8x128xi32>
    %97 = arith.sitofp %96 : vector<8x128xi32> to vector<8x128xf32>
    %c0_i32_48 = arith.constant 0 : i32
    %98 = vector.broadcast %c0_i32_48 : i32 to vector<8x128xi32>
    %99 = arith.cmpi eq, %89, %98 : vector<8x128xi32>
    %c1_i32 = arith.constant 1 : i32
    %100 = vector.broadcast %c1_i32 : i32 to vector<8x128xi32>
    %101 = arith.cmpi eq, %90, %100 : vector<8x128xi32>
    %102 = arith.andi %99, %101 : vector<8x128xi1>
    %103 = arith.extui %102 : vector<8x128xi1> to vector<8x128xi32>
    %104 = arith.sitofp %103 : vector<8x128xi32> to vector<8x128xf32>
    %105 = vector.broadcast %83 : vector<1x1xf32> to vector<8x128xf32>
    %106 = arith.mulf %105, %97 : vector<8x128xf32>
    %107 = vector.broadcast %88 : vector<1x1xf32> to vector<8x128xf32>
    %108 = arith.mulf %107, %104 : vector<8x128xf32>
    %109 = arith.addf %106, %108 : vector<8x128xf32>
    %c0_49 = arith.constant 0 : index
    %c0_50 = arith.constant 0 : index
    %110 = vector.load %arg15[%c0_49, %c0_50] : memref<8x128xf32, #tpu.memory_space<vmem>>, vector<8x128xf32>
    tpu.vector_store %arg15[%c0_49, %c0_50], %109 {strides = array<i32>} : memref<8x128xf32, #tpu.memory_space<vmem>>, vector<8x128xf32>,
    return
  }
  func.func @transform_0(%arg0: i32) -> (i32, i32) {
    %c0_i32 = arith.constant 0 : i32
    %c0_i32_0 = arith.constant 0 : i32
    return %arg0, %c0_i32 : i32, i32
  }
  func.func @transform_1(%arg0: i32) -> (i32, i32) {
    %c0_i32 = arith.constant 0 : i32
    %c0_i32_0 = arith.constant 0 : i32
    return %arg0, %c0_i32 : i32, i32
  }
  func.func @transform_2(%arg0: i32) -> (i32, i32) {
    %c0_i32 = arith.constant 0 : i32
    %c0_i32_0 = arith.constant 0 : i32
    return %arg0, %c0_i32 : i32, i32
  }
  func.func @transform_3(%arg0: i32) -> (i32, i32) {
    %c0_i32 = arith.constant 0 : i32
    %c0_i32_0 = arith.constant 0 : i32
    return %arg0, %c0_i32 : i32, i32
  }
  func.func @transform_4(%arg0: i32) -> (i32, i32) {
    %c0_i32 = arith.constant 0 : i32
    %c0_i32_0 = arith.constant 0 : i32
    %c0_i32_1 = arith.constant 0 : i32
    return %c0_i32, %c0_i32_0 : i32, i32
  }
  func.func @transform_5(%arg0: i32) -> (i32, i32) {
    %c0_i32 = arith.constant 0 : i32
    %c0_i32_0 = arith.constant 0 : i32
    %c0_i32_1 = arith.constant 0 : i32
    return %c0_i32, %c0_i32_0 : i32, i32
  }
  func.func @transform_6(%arg0: i32) -> (i32, i32) {
    %c0_i32 = arith.constant 0 : i32
    %c0_i32_0 = arith.constant 0 : i32
    %c0_i32_1 = arith.constant 0 : i32
    return %c0_i32, %c0_i32_0 : i32, i32
  }
  func.func @transform_7(%arg0: i32) -> (i32, i32) {
    %c0_i32 = arith.constant 0 : i32
    %c0_i32_0 = arith.constant 0 : i32
    %c0_i32_1 = arith.constant 0 : i32
    return %c0_i32, %c0_i32_0 : i32, i32
  }
  func.func @transform_8(%arg0: i32) -> (i32, i32) {
    %c0_i32 = arith.constant 0 : i32
    %c0_i32_0 = arith.constant 0 : i32
    %c0_i32_1 = arith.constant 0 : i32
    return %c0_i32, %c0_i32_0 : i32, i32
  }
  func.func @transform_9(%arg0: i32) -> (i32, i32) {
    %c0_i32 = arith.constant 0 : i32
    %c0_i32_0 = arith.constant 0 : i32
    %c0_i32_1 = arith.constant 0 : i32
    return %c0_i32, %c0_i32_0 : i32, i32
  }
  func.func @transform_10(%arg0: i32) -> (i32, i32) {
    %c0_i32 = arith.constant 0 : i32
    %c0_i32_0 = arith.constant 0 : i32
    %c0_i32_1 = arith.constant 0 : i32
    return %c0_i32, %c0_i32_0 : i32, i32
  }
  func.func @transform_11(%arg0: i32) -> (i32, i32) {
    %c0_i32 = arith.constant 0 : i32
    %c0_i32_0 = arith.constant 0 : i32
    %c0_i32_1 = arith.constant 0 : i32
    return %c0_i32, %c0_i32_0 : i32, i32
  }
  func.func @transform_12(%arg0: i32) -> (i32, i32) {
    %c0_i32 = arith.constant 0 : i32
    %c0_i32_0 = arith.constant 0 : i32
    %c0_i32_1 = arith.constant 0 : i32
    return %c0_i32, %c0_i32_0 : i32, i32
  }
  func.func @transform_13(%arg0: i32) -> (i32, i32) {
    %c0_i32 = arith.constant 0 : i32
    %c0_i32_0 = arith.constant 0 : i32
    return %arg0, %c0_i32 : i32, i32
  }
  func.func @transform_14(%arg0: i32) -> (i32, i32) {
    %c0_i32 = arith.constant 0 : i32
    %c0_i32_0 = arith.constant 0 : i32
    return %arg0, %c0_i32 : i32, i32
  }
}

</mosaic_0001>

<llo_original>
// kernel: net_forward.1
$region0: #{net_forward.1}
  #allocation0 [shape = 'u32[]', space=smem, size = 0x4, offset = 0x4, fixed_abs, tag = 'smem constant byte address 0x4 - core index']
  #allocation1 [shape = 'u32[144,128]{1,0:T(1,128)}', space=vmem, size = 0x12000, scoped, tag = 'internal scratch']
  %s0 = inlined_call_operand.vmem [shape: f32[8,10], index: 0, kind: input, shape index: {}]
  %s1 = inlined_call_operand.vmem [shape: f32[8,10], index: 1, kind: input, shape index: {}]
  %s2 = inlined_call_operand.vmem [shape: f32[8,100], index: 2, kind: input, shape index: {}]
  %s3 = inlined_call_operand.vmem [shape: f32[8,100], index: 3, kind: input, shape index: {}]
  %s4 = inlined_call_operand.vmem [shape: bf16[128,256], index: 4, kind: input, shape index: {}]
  %s5 = inlined_call_operand.vmem [shape: bf16[10,26], index: 5, kind: input, shape index: {}]
  %s6 = inlined_call_operand.vmem [shape: f32[1,26], index: 6, kind: input, shape index: {}]
  %s7 = inlined_call_operand.vmem [shape: bf16[26,26], index: 7, kind: input, shape index: {}]
  %s8 = inlined_call_operand.vmem [shape: f32[1,26], index: 8, kind: input, shape index: {}]
  %s9 = inlined_call_operand.vmem [shape: bf16[26,22], index: 9, kind: input, shape index: {}]
  %s10 = inlined_call_operand.vmem [shape: f32[1,22], index: 10, kind: input, shape index: {}]
  %s11 = inlined_call_operand.vmem [shape: bf16[22,128], index: 11, kind: input, shape index: {}]
  %s12 = inlined_call_operand.vmem [shape: f32[1,128], index: 12, kind: input, shape index: {}]
  %s13 = inlined_call_operand.hbm [shape: f32[8,10], index: 13, kind: output, shape index: {0}]
  %s14 = inlined_call_operand.vmem [shape: f32[8,128], index: 14, kind: output, shape index: {1}]
  %15 = xla_tuple %s13, %s14
  %s16 = sld [smem:[#allocation0]]
  $region70: #{net_forward.1} parent=0
    _
  %s18 = ssub.s32 1, %s16
  %s19 = scalar_select 0, %s18, %s16
  $region1: #{net_forward.1} parent=0
    #allocation2 [shape = 'u8[4096]{0}', space=vmem, size = 0x1000, scoped, tag = 'output window, operand 0, single buffered']
    #allocation3 [shape = 's32[1]{0}', space=sflag, size = 0x4, scoped, tag = 'scoped memory for net_forward.1']
    %20 = vsyncpa [#allocation3], 0
    // Predicated region
    $region2: #{net_forward.1} parent=1 // pred_check
      _
    $region3: #{net_forward.1} parent=1 // pred_check_branch
      %22 = sbr.rel (0) target = $region5
    $region4: #{net_forward.1} parent=1 // pred_region
      _
    $region5: #{net_forward.1} parent=1 // pred_fallthru
      _
    // Predicated region
    $region6: #{net_forward.1} parent=1 // pred_check
      _
    $region7: #{net_forward.1} parent=1 // pred_check_branch
      %24 = sbr.rel (0) target = $region9
    $region8: #{net_forward.1} parent=1 // pred_region
      _
    $region9: #{net_forward.1} parent=1 // pred_fallthru
      _
    // Predicated region
    $region10: #{net_forward.1} parent=1 // pred_check
      _
    $region11: #{net_forward.1} parent=1 // pred_check_branch
      %26 = sbr.rel (0) target = $region13
    $region12: #{net_forward.1} parent=1 // pred_region
      _
    $region13: #{net_forward.1} parent=1 // pred_fallthru
      _
    // Predicated region
    $region14: #{net_forward.1} parent=1 // pred_check
      _
    $region15: #{net_forward.1} parent=1 // pred_check_branch
      %28 = sbr.rel (0) target = $region17
    $region16: #{net_forward.1} parent=1 // pred_region
      _
    $region17: #{net_forward.1} parent=1 // pred_fallthru
      _
    // Predicated region
    $region18: #{net_forward.1} parent=1 // pred_check
      _
    $region19: #{net_forward.1} parent=1 // pred_check_branch
      %30 = sbr.rel (0) target = $region21
    $region20: #{net_forward.1} parent=1 // pred_region
      _
    $region21: #{net_forward.1} parent=1 // pred_fallthru
      _
    // Predicated region
    $region22: #{net_forward.1} parent=1 // pred_check
      _
    $region23: #{net_forward.1} parent=1 // pred_check_branch
      %32 = sbr.rel (0) target = $region25
    $region24: #{net_forward.1} parent=1 // pred_region
      _
    $region25: #{net_forward.1} parent=1 // pred_fallthru
      _
    // Predicated region
    $region26: #{net_forward.1} parent=1 // pred_check
      _
    $region27: #{net_forward.1} parent=1 // pred_check_branch
      %34 = sbr.rel (0) target = $region29
    $region28: #{net_forward.1} parent=1 // pred_region
      _
    $region29: #{net_forward.1} parent=1 // pred_fallthru
      _
    // Predicated region
    $region30: #{net_forward.1} parent=1 // pred_check
      _
    $region31: #{net_forward.1} parent=1 // pred_check_branch
      %36 = sbr.rel (0) target = $region33
    $region32: #{net_forward.1} parent=1 // pred_region
      _
    $region33: #{net_forward.1} parent=1 // pred_fallthru
      _
    // Predicated region
    $region34: #{net_forward.1} parent=1 // pred_check
      _
    $region35: #{net_forward.1} parent=1 // pred_check_branch
      %38 = sbr.rel (0) target = $region37
    $region36: #{net_forward.1} parent=1 // pred_region
      _
    $region37: #{net_forward.1} parent=1 // pred_fallthru
      _
    // Predicated region
    $region38: #{net_forward.1} parent=1 // pred_check
      _
    $region39: #{net_forward.1} parent=1 // pred_check_branch
      %40 = sbr.rel (0) target = $region41
    $region40: #{net_forward.1} parent=1 // pred_region
      _
    $region41: #{net_forward.1} parent=1 // pred_fallthru
      _
    // Predicated region
    $region42: #{net_forward.1} parent=1 // pred_check
      _
    $region43: #{net_forward.1} parent=1 // pred_check_branch
      %42 = sbr.rel (0) target = $region45
    $region44: #{net_forward.1} parent=1 // pred_region
      _
    $region45: #{net_forward.1} parent=1 // pred_fallthru
      _
    // Predicated region
    $region46: #{net_forward.1} parent=1 // pred_check
      _
    $region47: #{net_forward.1} parent=1 // pred_check_branch
      %44 = sbr.rel (0) target = $region49
    $region48: #{net_forward.1} parent=1 // pred_region
      _
    $region49: #{net_forward.1} parent=1 // pred_fallthru
      _
    // Predicated region
    $region50: #{net_forward.1} parent=1 // pred_check
      _
    $region51: #{net_forward.1} parent=1 // pred_check_branch
      %46 = sbr.rel (0) target = $region53
    $region52: #{net_forward.1} parent=1 // pred_region
      _
    $region53: #{net_forward.1} parent=1 // pred_fallthru
      _
    %v48 = vld [vmem:[%s0] sm:$0xff]
    %v49 = vpack.c.bf16 %v48, %v48
    %v50 = vld [vmem:[%s5] sm:$0xf]
    %v51 = vld [vmem:[%s5 + $0x4] sm:$0x1]
    %v52 = vld [vmem:[%s6] sm:$0x1]
    %v54 = vlaneseq
    %v55 = vshrl.u32 %v54, 7
    %v56 = vsub.s32 0, %v55
    %v57 = vrot.slane %v52, %v56
    %v61 = vunpack.c.l.b16 %v50
    %v62 = vunpack.c.l.b16 %v51
    %v63 = vpack.c.b16 %v62, %v61
    %vm64 = vcmask 80896
    %v66 = vsel %vm64, %v49, 0
    %vm68 = vcmask 1044480
    %v70 = vsel %vm68, %v63, 0
    %72 = vmatprep.subr.bf16.mxu0 0
    %73 = vmatpush1.bf16.msra.mxu0 0
    %74 = vmatprep.subr.bf16.mxu0 0
    %75 = vmatpush1.bf16.msra.mxu0 0
    %76 = vmatprep.subr.bf16.mxu0 0
    %77 = vmatpush1.bf16.msra.mxu0 0
    %78 = vmatprep.subr.bf16.mxu0 0
    %79 = vmatpush1.bf16.msra.mxu0 0
    %80 = vmatprep.subr.bf16.mxu0 0
    %81 = vmatpush1.bf16.msra.mxu0 0
    %82 = vmatprep.subr.bf16.mxu0 0
    %83 = vmatpush1.bf16.msra.mxu0 0
    %84 = vmatprep.subr.bf16.mxu0 0
    %85 = vmatpush1.bf16.msra.mxu0 0
    %86 = vmatprep.subr.bf16.mxu0 0
    %87 = vmatpush1.bf16.msra.mxu0 %v70
    %88 = vmatprep.subr.bf16.mxu0 0
    %89 = vmatpush2.bf16.msra.mxu0 0
    %90 = vmatprep.subr.bf16.mxu0 0
    %91 = vmatpush2.bf16.msra.mxu0 0
    %92 = vmatprep.subr.bf16.mxu0 0
    %93 = vmatpush2.bf16.msra.mxu0 0
    %94 = vmatprep.subr.bf16.mxu0 0
    %95 = vmatpush2.bf16.msra.mxu0 0
    %96 = vmatprep.subr.bf16.mxu0 0
    %97 = vmatpush2.bf16.msra.mxu0 0
    %98 = vmatprep.subr.bf16.mxu0 0
    %99 = vmatpush2.bf16.msra.mxu0 0
    %100 = vmatprep.subr.bf16.mxu0 0
    %101 = vmatpush2.bf16.msra.mxu0 0
    %102 = vmatprep.subr.bf16.mxu0 0
    %103 = vmatpush2.bf16.msra.mxu0 0
    %104 = vmatprep.mubr.bf16.mxu0 0
    %105 = vmatmul.mubr.bf16.gmra.mxu0 %v66
    %v106 = vpop.f32.mrf.mxu0
    %v107 = vadd.f32 %v57, %v106
    %v108 = vpop.f32.mrf.mxu0
    %v109 = vpop.f32.mrf.mxu0
    %v110 = vpop.f32.mrf.mxu0
    %111 = vdwg.mxu0
    %vm112 = vcmp.ge.f32.partialorder %v107, 0.0
    %v113 = vmul.f32 %v107, 0.01
    %v114 = vsel %vm112, %v107, %v113
    %v115 = vpack.c.bf16 %v114, %v114
    %v116 = vld [vmem:[%s7] sm:$0xf]
    %v117 = vld [vmem:[%s7 + $0x4] sm:$0xf]
    %v118 = vld [vmem:[%s7 + $0x8] sm:$0xf]
    %v119 = vld [vmem:[%s7 + $0xc] sm:$0x1]
    %v120 = vld [vmem:[%s8] sm:$0x1]
    %v122 = vlaneseq
    %v123 = vshrl.u32 %v122, 7
    %v124 = vsub.s32 0, %v123
    %v125 = vrot.slane %v120, %v124
    %v131 = vunpack.c.l.b16 %v116
    %v132 = vunpack.c.l.b16 %v117
    %v133 = vunpack.c.l.b16 %v118
    %v134 = vunpack.c.l.b16 %v119
    %v135 = vpack.c.b16 %v132, %v131
    %v136 = vpack.c.b16 %v134, %v133
    %vm138 = vcmask 211968
    %v140 = vsel %vm138, %v115, 0
    %v143 = vsel %vm68, %v136, 0
    %145 = vmatprep.subr.bf16.mxu0 0
    %146 = vmatpush1.bf16.msra.mxu0 0
    %147 = vmatprep.subr.bf16.mxu0 0
    %148 = vmatpush1.bf16.msra.mxu0 0
    %149 = vmatprep.subr.bf16.mxu0 0
    %150 = vmatpush1.bf16.msra.mxu0 0
    %151 = vmatprep.subr.bf16.mxu0 0
    %152 = vmatpush1.bf16.msra.mxu0 0
    %153 = vmatprep.subr.bf16.mxu0 0
    %154 = vmatpush1.bf16.msra.mxu0 0
    %155 = vmatprep.subr.bf16.mxu0 0
    %156 = vmatpush1.bf16.msra.mxu0 0
    %157 = vmatprep.subr.bf16.mxu0 0
    %158 = vmatpush1.bf16.msra.mxu0 %v143
    %159 = vmatprep.subr.bf16.mxu0 0
    %160 = vmatpush1.bf16.msra.mxu0 %v135
    %161 = vmatprep.subr.bf16.mxu0 0
    %162 = vmatpush2.bf16.msra.mxu0 0
    %163 = vmatprep.subr.bf16.mxu0 0
    %164 = vmatpush2.bf16.msra.mxu0 0
    %165 = vmatprep.subr.bf16.mxu0 0
    %166 = vmatpush2.bf16.msra.mxu0 0
    %167 = vmatprep.subr.bf16.mxu0 0
    %168 = vmatpush2.bf16.msra.mxu0 0
    %169 = vmatprep.subr.bf16.mxu0 0
    %170 = vmatpush2.bf16.msra.mxu0 0
    %171 = vmatprep.subr.bf16.mxu0 0
    %172 = vmatpush2.bf16.msra.mxu0 0
    %173 = vmatprep.subr.bf16.mxu0 0
    %174 = vmatpush2.bf16.msra.mxu0 0
    %175 = vmatprep.subr.bf16.mxu0 0
    %176 = vmatpush2.bf16.msra.mxu0 0
    %177 = vmatprep.mubr.bf16.mxu0 0
    %178 = vmatmul.mubr.bf16.gmra.mxu0 %v140
    %v179 = vpop.f32.mrf.mxu0
    %v180 = vadd.f32 %v125, %v179
    %v181 = vpop.f32.mrf.mxu0
    %v182 = vpop.f32.mrf.mxu0
    %v183 = vpop.f32.mrf.mxu0
    %184 = vdwg.mxu0
    %vm185 = vcmp.ge.f32.partialorder %v180, 0.0
    %v186 = vmul.f32 %v180, 0.01
    %v187 = vsel %vm185, %v180, %v186
    %v188 = vpack.c.bf16 %v187, %v187
    %v189 = vld [vmem:[%s9] sm:$0xf]
    %v190 = vld [vmem:[%s9 + $0x4] sm:$0xf]
    %v191 = vld [vmem:[%s9 + $0x8] sm:$0xf]
    %v192 = vld [vmem:[%s9 + $0xc] sm:$0x1]
    %v193 = vld [vmem:[%s10] sm:$0x1]
    %v195 = vlaneseq
    %v196 = vshrl.u32 %v195, 7
    %v197 = vsub.s32 0, %v196
    %v198 = vrot.slane %v193, %v197
    %v204 = vunpack.c.l.b16 %v189
    %v205 = vunpack.c.l.b16 %v190
    %v206 = vunpack.c.l.b16 %v191
    %v207 = vunpack.c.l.b16 %v192
    %v208 = vpack.c.b16 %v205, %v204
    %v209 = vpack.c.b16 %v207, %v206
    %v212 = vsel %vm138, %v188, 0
    %v215 = vsel %vm68, %v209, 0
    %217 = vmatprep.subr.bf16.mxu0 0
    %218 = vmatpush1.bf16.msra.mxu0 0
    %219 = vmatprep.subr.bf16.mxu0 0
    %220 = vmatpush1.bf16.msra.mxu0 0
    %221 = vmatprep.subr.bf16.mxu0 0
    %222 = vmatpush1.bf16.msra.mxu0 0
    %223 = vmatprep.subr.bf16.mxu0 0
    %224 = vmatpush1.bf16.msra.mxu0 0
    %225 = vmatprep.subr.bf16.mxu0 0
    %226 = vmatpush1.bf16.msra.mxu0 0
    %227 = vmatprep.subr.bf16.mxu0 0
    %228 = vmatpush1.bf16.msra.mxu0 0
    %229 = vmatprep.subr.bf16.mxu0 0
    %230 = vmatpush1.bf16.msra.mxu0 %v215
    %231 = vmatprep.subr.bf16.mxu0 0
    %232 = vmatpush1.bf16.msra.mxu0 %v208
    %233 = vmatprep.subr.bf16.mxu0 0
    %234 = vmatpush2.bf16.msra.mxu0 0
    %235 = vmatprep.subr.bf16.mxu0 0
    %236 = vmatpush2.bf16.msra.mxu0 0
    %237 = vmatprep.subr.bf16.mxu0 0
    %238 = vmatpush2.bf16.msra.mxu0 0
    %239 = vmatprep.subr.bf16.mxu0 0
    %240 = vmatpush2.bf16.msra.mxu0 0
    %241 = vmatprep.subr.bf16.mxu0 0
    %242 = vmatpush2.bf16.msra.mxu0 0
    %243 = vmatprep.subr.bf16.mxu0 0
    %244 = vmatpush2.bf16.msra.mxu0 0
    %245 = vmatprep.subr.bf16.mxu0 0
    %246 = vmatpush2.bf16.msra.mxu0 0
    %247 = vmatprep.subr.bf16.mxu0 0
    %248 = vmatpush2.bf16.msra.mxu0 0
    %249 = vmatprep.mubr.bf16.mxu0 0
    %250 = vmatmul.mubr.bf16.gmra.mxu0 %v212
    %v251 = vpop.f32.mrf.mxu0
    %v252 = vadd.f32 %v198, %v251
    %v253 = vpop.f32.mrf.mxu0
    %v254 = vpop.f32.mrf.mxu0
    %v255 = vpop.f32.mrf.mxu0
    %256 = vdwg.mxu0
    %vm257 = vcmp.ge.f32.partialorder %v252, 0.0
    %v258 = vmul.f32 %v252, 0.01
    %v259 = vsel %vm257, %v252, %v258
    %v260 = vpack.c.bf16 %v259, %v259
    %v261 = vld [vmem:[%s11] sm:$0xf]
    %v262 = vld [vmem:[%s11 + $0x4] sm:$0xf]
    %v263 = vld [vmem:[%s11 + $0x8] sm:$0x7]
    %v264 = vld [vmem:[%s12] sm:$0x1]
    %v266 = vlaneseq
    %v267 = vshrl.u32 %v266, 7
    %v268 = vsub.s32 0, %v267
    %v269 = vrot.slane %v264, %v268
    %v274 = vunpack.c.l.b16 %v261
    %v275 = vunpack.c.l.b16 %v262
    %v276 = vunpack.c.l.b16 %v263
    %v277 = vpack.c.b16 %v275, %v274
    %v278 = vpack.c.b16 %v276, %v276
    %vm280 = vcmask 179200
    %v282 = vsel %vm280, %v260, 0
    %vm284 = vcmask 1042432
    %v286 = vsel %vm284, %v278, 0
    %288 = vmatprep.subr.bf16.mxu0 0
    %289 = vmatpush1.bf16.msra.mxu0 0
    %290 = vmatprep.subr.bf16.mxu0 0
    %291 = vmatpush1.bf16.msra.mxu0 0
    %292 = vmatprep.subr.bf16.mxu0 0
    %293 = vmatpush1.bf16.msra.mxu0 0
    %294 = vmatprep.subr.bf16.mxu0 0
    %295 = vmatpush1.bf16.msra.mxu0 0
    %296 = vmatprep.subr.bf16.mxu0 0
    %297 = vmatpush1.bf16.msra.mxu0 0
    %298 = vmatprep.subr.bf16.mxu0 0
    %299 = vmatpush1.bf16.msra.mxu0 0
    %300 = vmatprep.subr.bf16.mxu0 0
    %301 = vmatpush1.bf16.msra.mxu0 %v286
    %302 = vmatprep.subr.bf16.mxu0 0
    %303 = vmatpush1.bf16.msra.mxu0 %v277
    %304 = vmatprep.subr.bf16.mxu0 0
    %305 = vmatpush2.bf16.msra.mxu0 0
    %306 = vmatprep.subr.bf16.mxu0 0
    %307 = vmatpush2.bf16.msra.mxu0 0
    %308 = vmatprep.subr.bf16.mxu0 0
    %309 = vmatpush2.bf16.msra.mxu0 0
    %310 = vmatprep.subr.bf16.mxu0 0
    %311 = vmatpush2.bf16.msra.mxu0 0
    %312 = vmatprep.subr.bf16.mxu0 0
    %313 = vmatpush2.bf16.msra.mxu0 0
    %314 = vmatprep.subr.bf16.mxu0 0
    %315 = vmatpush2.bf16.msra.mxu0 0
    %316 = vmatprep.subr.bf16.mxu0 0
    %317 = vmatpush2.bf16.msra.mxu0 0
    %318 = vmatprep.subr.bf16.mxu0 0
    %319 = vmatpush2.bf16.msra.mxu0 0
    %320 = vmatprep.mubr.bf16.mxu0 0
    %321 = vmatmul.mubr.bf16.gmra.mxu0 %v282
    %v322 = vpop.f32.mrf.mxu0
    %v323 = vadd.f32 %v269, %v322
    %v324 = vpop.f32.mrf.mxu0
    %v325 = vpop.f32.mrf.mxu0
    %v326 = vpop.f32.mrf.mxu0
    %327 = vdwg.mxu0
    %v328 = vxor.u32 %v323, 2147483648
    %v329 = vmul.f32 %v328, 1.442695
    %v330 = vpow.pop %v329
    %v331 = vadd.f32 %v330, 1.0
    %v332 = vrcp.pop %v331
    %v333 = vmul.f32 1.0, %v332
    %v334 = vpack.c.bf16 %v333, %v333
    %v335 = vld [vmem:[%s4] sm:$0xff]
    %v336 = vld [vmem:[%s4 + $0x8] sm:$0xff]
    %v337 = vld [vmem:[%s4 + $0x10] sm:$0xff]
    %v338 = vld [vmem:[%s4 + $0x18] sm:$0xff]
    %v339 = vld [vmem:[%s4 + $0x20] sm:$0xff]
    %v340 = vld [vmem:[%s4 + $0x28] sm:$0xff]
    %v341 = vld [vmem:[%s4 + $0x30] sm:$0xff]
    %v342 = vld [vmem:[%s4 + $0x38] sm:$0xff]
    %v343 = vld [vmem:[%s4 + $0x40] sm:$0xff]
    %v344 = vld [vmem:[%s4 + $0x48] sm:$0xff]
    %v345 = vld [vmem:[%s4 + $0x50] sm:$0xff]
    %v346 = vld [vmem:[%s4 + $0x58] sm:$0xff]
    %v347 = vld [vmem:[%s4 + $0x60] sm:$0xff]
    %v348 = vld [vmem:[%s4 + $0x68] sm:$0xff]
    %v349 = vld [vmem:[%s4 + $0x70] sm:$0xff]
    %v350 = vld [vmem:[%s4 + $0x78] sm:$0xff]
    %v367 = vunpack.c.l.b16 %v335
    %v368 = vunpack.c.h.b16 %v335
    %v369 = vunpack.c.l.b16 %v336
    %v370 = vunpack.c.h.b16 %v336
    %v371 = vunpack.c.l.b16 %v337
    %v372 = vunpack.c.h.b16 %v337
    %v373 = vunpack.c.l.b16 %v338
    %v374 = vunpack.c.h.b16 %v338
    %v375 = vunpack.c.l.b16 %v339
    %v376 = vunpack.c.h.b16 %v339
    %v377 = vunpack.c.l.b16 %v340
    %v378 = vunpack.c.h.b16 %v340
    %v379 = vunpack.c.l.b16 %v341
    %v380 = vunpack.c.h.b16 %v341
    %v381 = vunpack.c.l.b16 %v342
    %v382 = vunpack.c.h.b16 %v342
    %v383 = vunpack.c.l.b16 %v343
    %v384 = vunpack.c.h.b16 %v343
    %v385 = vunpack.c.l.b16 %v344
    %v386 = vunpack.c.h.b16 %v344
    %v387 = vunpack.c.l.b16 %v345
    %v388 = vunpack.c.h.b16 %v345
    %v389 = vunpack.c.l.b16 %v346
    %v390 = vunpack.c.h.b16 %v346
    %v391 = vunpack.c.l.b16 %v347
    %v392 = vunpack.c.h.b16 %v347
    %v393 = vunpack.c.l.b16 %v348
    %v394 = vunpack.c.h.b16 %v348
    %v395 = vunpack.c.l.b16 %v349
    %v396 = vunpack.c.h.b16 %v349
    %v397 = vunpack.c.l.b16 %v350
    %v398 = vunpack.c.h.b16 %v350
    %v399 = vpack.c.b16 %v369, %v367
    %v400 = vpack.c.b16 %v370, %v368
    %v401 = vpack.c.b16 %v373, %v371
    %v402 = vpack.c.b16 %v374, %v372
    %v403 = vpack.c.b16 %v377, %v375
    %v404 = vpack.c.b16 %v378, %v376
    %v405 = vpack.c.b16 %v381, %v379
    %v406 = vpack.c.b16 %v382, %v380
    %v407 = vpack.c.b16 %v385, %v383
    %v408 = vpack.c.b16 %v386, %v384
    %v409 = vpack.c.b16 %v389, %v387
    %v410 = vpack.c.b16 %v390, %v388
    %v411 = vpack.c.b16 %v393, %v391
    %v412 = vpack.c.b16 %v394, %v392
    %v413 = vpack.c.b16 %v397, %v395
    %v414 = vpack.c.b16 %v398, %v396
    %431 = vmatprep.subr.bf16.mxu0 %v414
    %432 = vmatpush1.bf16.msra.mxu0 %v413
    %433 = vmatprep.subr.bf16.mxu0 %v412
    %434 = vmatpush1.bf16.msra.mxu0 %v411
    %435 = vmatprep.subr.bf16.mxu0 %v410
    %436 = vmatpush1.bf16.msra.mxu0 %v409
    %437 = vmatprep.subr.bf16.mxu0 %v408
    %438 = vmatpush1.bf16.msra.mxu0 %v407
    %439 = vmatprep.subr.bf16.mxu0 %v406
    %440 = vmatpush1.bf16.msra.mxu0 %v405
    %441 = vmatprep.subr.bf16.mxu0 %v404
    %442 = vmatpush1.bf16.msra.mxu0 %v403
    %443 = vmatprep.subr.bf16.mxu0 %v402
    %444 = vmatpush1.bf16.msra.mxu0 %v401
    %445 = vmatprep.subr.bf16.mxu0 %v400
    %446 = vmatpush1.bf16.msra.mxu0 %v399
    %447 = vmatprep.subr.bf16.mxu0 0
    %448 = vmatpush2.bf16.msra.mxu0 0
    %449 = vmatprep.subr.bf16.mxu0 0
    %450 = vmatpush2.bf16.msra.mxu0 0
    %451 = vmatprep.subr.bf16.mxu0 0
    %452 = vmatpush2.bf16.msra.mxu0 0
    %453 = vmatprep.subr.bf16.mxu0 0
    %454 = vmatpush2.bf16.msra.mxu0 0
    %455 = vmatprep.subr.bf16.mxu0 0
    %456 = vmatpush2.bf16.msra.mxu0 0
    %457 = vmatprep.subr.bf16.mxu0 0
    %458 = vmatpush2.bf16.msra.mxu0 0
    %459 = vmatprep.subr.bf16.mxu0 0
    %460 = vmatpush2.bf16.msra.mxu0 0
    %461 = vmatprep.subr.bf16.mxu0 0
    %462 = vmatpush2.bf16.msra.mxu0 0
    %463 = vmatprep.mubr.bf16.mxu0 0
    %464 = vmatmul.mubr.bf16.gmra.mxu0 %v334
    %v465 = vpop.f32.mrf.mxu0
    %v466 = vadd.f32 0.0, %v465
    %v467 = vpop.f32.mrf.mxu0
    %v468 = vadd.f32 0.0, %v467
    %v469 = vpop.f32.mrf.mxu0
    %v470 = vpop.f32.mrf.mxu0
    %471 = vdwg.mxu0
    %v472 = vmul.f32 %v468, 0.5
    %v473 = vmul.f32 %v466, %v472
    %v474 = vmax.f32 %v473, 1e-06
    %v475 = vmin.f32 %v474, 0.999999
    %v476 = vlog2.pop %v475
    %v477 = vmul.f32 %v476, 0.6931472
    %v478 = vld [vmem:[%s2] sm:$0xff]
    %v479 = vmul.f32 %v477, %v478
    %v480 = vsub.f32 1.0, %v475
    %v481 = vlog2.pop %v480
    %v482 = vmul.f32 %v481, 0.6931472
    %v483 = vld [vmem:[%s3] sm:$0xff]
    %v484 = vmul.f32 %v482, %v483
    %v485 = vadd.f32 %v479, %v484
    %v486 = vrcp.pop %v333
    %488 = vset.pattern.permute.xlu0 0
    %489 = vperm.xlu0 %488, %v486
    %v490 = vpop.permute.xlu0 %489
    %v492 = vmul.f32 %v333, %v490
    %493 = vst.msk [vmem:[#allocation2] sm:$0xff] %vm64, %v492
    %v494 = vld [vmem:[%s1] sm:$0xff]
    %v495 = vsub.f32 %v494, %v492
    %v496 = vrcp.pop %v494
    %v497 = vmul.f32 %v495, %v496
    %v498 = vand.u32 2147483647, %v497
    %vm499 = vcmask 818176
    %v500 = vsel %vm499, %v485, 0.0
    %501 = vadd.xlane.f32.xlu0 %v500
    %v502 = vpop.xlane.xlu0 %501
    %v503 = vrot.slane %v502, 4
    %v504 = vadd.f32 %v502, %v503
    %v505 = vrot.slane %v504, 2
    %v506 = vadd.f32 %v504, %v505
    %v507 = vrot.slane %v506, 1
    %v508 = vadd.f32 %v506, %v507
    %s509 = vtos %v508
    %s510 = ssub.f32 0.0, %s509
    %v511 = vsel %vm64, %v498, 0.0
    %512 = vadd.xlane.f32.xlu0 %v511
    %v513 = vpop.xlane.xlu0 %512
    %v514 = vrot.slane %v513, 4
    %v515 = vadd.f32 %v513, %v514
    %v516 = vrot.slane %v515, 2
    %v517 = vadd.f32 %v515, %v516
    %v518 = vrot.slane %v517, 1
    %v519 = vadd.f32 %v517, %v518
    %s520 = vtos %v519
    %v521 = vlaneseq
    %v522 = vshrl.u32 %v521, 7
    %v523 = vlaneseq
    %v524 = vand.u32 %v523, 127
    %vm525 = vcmp.eq.s32.totalorder %v522, 0
    %vm526 = vcmp.eq.s32.totalorder %v524, 0
    %vm527 = vmand %vm525, %vm526
    %v528 = vsel %vm527, 1, 0
    %v529 = vcvt.s32.f32 %v528
    %vm530 = vcmp.eq.s32.totalorder %v524, 1
    %vm531 = vmand %vm525, %vm530
    %v532 = vsel %vm531, 1, 0
    %v533 = vcvt.s32.f32 %v532
    %v534 = vstv %s510
    %v535 = vmul.f32 %v534, %v529
    %v536 = vstv %s520
    %v537 = vmul.f32 %v536, %v533
    %v538 = vadd.f32 %v535, %v537
    %539 = vst [vmem:[%s14] sm:$0xff] %v538
    // Predicated region
    $region54: #{net_forward.1} parent=1 // pred_check
      _
    $region55: #{net_forward.1} parent=1 // pred_check_branch
      %541 = sbr.rel (0) target = $region57
    $region56: #{net_forward.1} parent=1 // pred_region
      %s543 = ssub.s32 128, 128
      %544 = vsyncadd [#allocation3], %s543
      %s546 = sshll.u32 [#allocation2], 4
      %s547 = int_to_ptr.vmem [resolvable:$true] %s546
      %549 = dma.vmem_to_hbm [thread:$0]  %s547, 128, %s13, [#allocation3]
    $region57: #{net_forward.1} parent=1 // pred_fallthru
      _
    // Predicated region
    $region58: #{net_forward.1} parent=1 // pred_check
      _
    $region59: #{net_forward.1} parent=1 // pred_check_branch
      %551 = sbr.rel (0) target = $region61
    $region60: #{net_forward.1} parent=1 // pred_region
      _
    $region61: #{net_forward.1} parent=1 // pred_fallthru
      _
    // Predicated region
    $region62: #{net_forward.1} parent=1 // pred_check
      _
    $region63: #{net_forward.1} parent=1 // pred_check_branch
      %553 = sbr.rel (0) target = $region65
    $region64: #{net_forward.1} parent=1 // pred_region
      %554 = dma.done [#allocation3], 128
    $region65: #{net_forward.1} parent=1 // pred_fallthru
      _
    // Predicated region
    $region66: #{net_forward.1} parent=1 // pred_check
      _
    $region67: #{net_forward.1} parent=1 // pred_check_branch
      %556 = sbr.rel (0) target = $region69
    $region68: #{net_forward.1} parent=1 // pred_region
      _
    $region69: #{net_forward.1} parent=1 // pred_fallthru
      _
    %557 = vsyncpa [#allocation3], 1

</llo_original>
